<compile_context>
chip_gen: v5e
topology: v5e:2x2
jax: 0.10.0
libtpu: 0.0.40
codegen_flags: <defaults>
</compile_context>

<pallas_src>
import functools
import numpy as np
import jax
import jax.numpy as jnp
from jax.experimental import pallas as pl
from jax.experimental.pallas import tpu as pltpu


def _round_up(n, m):
    return ((n + m - 1) // m) * m


# --------------------------------- kernel ---------------------------------
def _hypernet_kernel(feat_ref, x_ref, w0_ref, b0_ref, w1_ref, b1_ref,
                     m1_ref, c1_ref, m2_ref, c2_ref, y_ref, *, dx, dh):
    f32 = jnp.float32

    # ---------- hyper MLP (MXU): feat -> H1 -> H2 (last hidden activation z) ----------
    z = jnp.dot(feat_ref[...], w0_ref[...], preferred_element_type=f32) + b0_ref[...]
    z = jnp.maximum(z, 0.0)                                   # LinearBlock + relu
    z = jnp.dot(z, w1_ref[...], preferred_element_type=f32) + b1_ref[...]
    z = jnp.maximum(z, 0.0)                                   # (TB, H2)

    x = x_ref[...]                                            # (TB, dx)

    # ---------- generated sub-net layer 1, bilinear fold onto the MXU ----------
    #   h[b,d] = relu( sum_i x[b,i] * W1gen[b,d,i] + b1gen[b,d] )
    #          = relu( [z⊗x | x | z][b,:] @ M1[:,d] + c1[d] )
    # z⊗x chunk i (width H2) is a lane-broadcast multiply: x[:, i] * z.
    cat1 = jnp.concatenate([x[:, i:i + 1] * z for i in range(dx)] + [x, z], axis=-1)
    h = jnp.dot(cat1, m1_ref[...], preferred_element_type=f32) + c1_ref[...]
    h = jnp.maximum(h, 0.0)                                   # (TB, dh)

    # ---------- generated sub-net layer 2 (M2/c2 zero-padded to dy_pad lanes) ----------
    cat2 = jnp.concatenate([h[:, d:d + 1] * z for d in range(dh)] + [h, z], axis=-1)
    y_ref[...] = jnp.dot(cat2, m2_ref[...], preferred_element_type=f32) + c2_ref[...]


# ----------------------- wrapper-side constant folding -----------------------
def _fold_generated_subnet(w2, b2, dx, dh, dy, h2, dy_pad):
    """Statically reshuffle the final hyper layer (torch layout: W2 (NW,H2), b2 (NW,))
    into the bilinear-fold operands:
        M1 (dx*H2 + dx + H2, dh), c1 (1, dh)
        M2 (dh*H2 + dh + H2, dy_pad), c2 (1, dy_pad)   (zero-padded columns)."""
    f32 = jnp.float32
    w2 = jnp.asarray(w2, f32).reshape(-1, h2)      # (NW, H2)
    b2 = jnp.asarray(b2, f32).reshape(-1)          # (NW,)
    off_b1 = dh * dx
    off_w2 = off_b1 + dh
    off_b2 = off_w2 + dy * dh

    # layer 1:  h_pre[b,d] = sum_{i,k} x[b,i] z[b,k] A1[i*H2+k,d]
    #                        + sum_i x[b,i] C1[i,d] + sum_k z[b,k] D1[k,d] + c1[d]
    a1 = jnp.transpose(w2[:off_b1].reshape(dh, dx, h2), (1, 2, 0)).reshape(dx * h2, dh)
    c1w = b2[:off_b1].reshape(dh, dx).T                        # (dx, dh)
    d1 = w2[off_b1:off_w2].T                                   # (H2, dh)
    m1 = jnp.concatenate([a1, c1w, d1], axis=0)
    c1 = b2[off_b1:off_w2].reshape(1, dh)

    # layer 2:  y[b,o] = sum_{d,k} h[b,d] z[b,k] A2[d*H2+k,o]
    #                    + sum_d h[b,d] C2[d,o] + sum_k z[b,k] D2[k,o] + c2[o]
    a2 = jnp.transpose(w2[off_w2:off_b2].reshape(dy, dh, h2), (1, 2, 0)).reshape(dh * h2, dy)
    c2w = b2[off_w2:off_b2].reshape(dy, dh).T                  # (dh, dy)
    d2 = w2[off_b2:].T                                         # (H2, dy)
    m2 = jnp.concatenate([a2, c2w, d2], axis=0)
    c2 = b2[off_b2:].reshape(1, dy)
    m2 = jnp.pad(m2, ((0, 0), (0, dy_pad - dy)))               # lane-dense output slab
    c2 = jnp.pad(c2, ((0, 0), (0, dy_pad - dy)))
    return m1, c1, m2, c2


def hypernet_forward(x, feat, hyper_params, subnet_dims, *, max_batch_tile=128):
    """x: (B, Dx), feat: (B, F) -> y: (B, Dy)."""
    dx, dh, dy = subnet_dims
    w0, b0, w1, b1, w2, b2 = hyper_params        # torch layout: W (out, in), b (out,)
    B, F = feat.shape
    H1 = w0.shape[0]
    H2 = w1.shape[0]
    NW = w2.shape[0]
    assert NW == dh * dx + dh + dy * dh + dy

    f32 = jnp.float32
    # hyper weights pre-transposed to (in, out): MXU consumes the RHS directly.
    w0t = jnp.asarray(w0, f32).T                 # (F, H1)
    w1t = jnp.asarray(w1, f32).T                 # (H1, H2)
    b0r = jnp.asarray(b0, f32).reshape(1, H1)
    b1r = jnp.asarray(b1, f32).reshape(1, H2)

    dy_pad = _round_up(dy, 128)                  # lane-dense output for any Dy
    m1, c1, m2, c2 = _fold_generated_subnet(w2, b2, dx, dh, dy, H2, dy_pad)
    k1 = dx * H2 + dx + H2                       # contraction dim of layer-1 fold
    k2 = dh * H2 + dh + H2                       # contraction dim of layer-2 fold

    # batch tile: sublane multiple, up to max_batch_tile, capped so the grid keeps
    # >= 2 "parallel" steps when the batch allows it (both TensorCores on v7x).
    b8 = _round_up(B, 8)
    tb = min(max_batch_tile, max(8, _round_up(b8 // 2, 8)))
    b_pad = _round_up(B, tb)
    featp = jnp.pad(jnp.asarray(feat, f32), ((0, b_pad - B), (0, 0)))
    xp = jnp.pad(jnp.asarray(x, f32), ((0, b_pad - B), (0, 0)))
    grid = (b_pad // tb,)

    kernel = functools.partial(_hypernet_kernel, dx=dx, dh=dh)

    full = lambda r, c: pl.BlockSpec((r, c), lambda i: (0, 0))   # constant weights
    in_specs = [
        pl.BlockSpec((tb, F), lambda i: (i, 0)),                 # feat, batch-tiled
        pl.BlockSpec((tb, dx), lambda i: (i, 0)),                # x, batch-tiled
        full(F, H1), full(1, H1),
        full(H1, H2), full(1, H2),
        full(k1, dh), full(1, dh),
        full(k2, dy_pad), full(1, dy_pad),
    ]
    out_specs = pl.BlockSpec((tb, dy_pad), lambda i: (i, 0))

    # Explicit VMEM budget: double-buffered batch tiles + (double-buffered) weights
    # + large in-kernel intermediates, 2x slack, floored at 8 MiB and capped at the
    # 32 MiB scoped default so the same config also fits on v7x.
    tile_b = 2 * tb * (F + dx + dy_pad) * 4
    wt_b = 2 * 4 * (w0t.size + b0r.size + w1t.size + b1r.size
                    + m1.size + c1.size + m2.size + c2.size)
    interm_b = 4 * tb * (H1 + H2 + k1 + dh + k2 + dy_pad)
    vmem_limit = int(min(32 * 1024 * 1024,
                         max(8 * 1024 * 1024, 2 * (tile_b + wt_b + interm_b))))

    flops = (2 * b_pad * (F * H1 + H1 * H2 + k1 * dh + k2 * dy_pad)
             + b_pad * (dx + dh) * H2)           # + outer-product builds
    bytes_accessed = 4 * (featp.size + xp.size + w0t.size + b0r.size + w1t.size
                          + b1r.size + m1.size + c1.size + m2.size + c2.size
                          + b_pad * dy_pad)
    cost = pl.CostEstimate(flops=int(flops), transcendentals=0,
                           bytes_accessed=int(bytes_accessed))

    y_pad = pl.pallas_call(
        kernel,
        out_shape=jax.ShapeDtypeStruct((b_pad, dy_pad), f32),
        grid=grid,
        in_specs=in_specs,
        out_specs=out_specs,
        compiler_params=pltpu.CompilerParams(
            dimension_semantics=("parallel",),
            vmem_limit_bytes=vmem_limit),
        cost_estimate=cost,
    )(featp, xp, w0t, b0r, w1t, b1r, m1, c1, m2, c2)

    return y_pad[:B, :dy]


# ------------------------ pure-JAX reference (torch semantics) ------------------------
def hypernet_reference(x, feat, hyper_params, subnet_dims):
    dx, dh, dy = subnet_dims
    w0, b0, w1, b1, w2, b2 = hyper_params
    h = jnp.maximum(feat @ w0.T + b0.reshape(1, -1), 0.0)
    h = jnp.maximum(h @ w1.T + b1.reshape(1, -1), 0.0)
    weights = h @ w2.T + b2.reshape(1, -1)

    outs = []
    for bi in range(x.shape[0]):
        wb = weights[bi]
        off = 0
        W1 = wb[off:off + dh * dx].reshape(dh, dx); off += dh * dx
        B1 = wb[off:off + dh];                      off += dh
        W2 = wb[off:off + dy * dh].reshape(dy, dh); off += dy * dh
        B2 = wb[off:off + dy]
        hb = jnp.maximum(x[bi] @ W1.T + B1, 0.0)
        outs.append(hb @ W2.T + B2)
    return jnp.stack(outs, axis=0)


if __name__ == "__main__":
    # Small shapes consistent with the module's forward.
    B, F = 2, 4            # batch, in_features (meta-features)
    H1, H2 = 32, 32        # hyper-net hidden layers (module default is (128,)*6)
    Dx, Dh, Dy = 16, 8, 4  # generated sub-network: Linear(16->8)+ReLU+Linear(8->4)
    NW = Dh * Dx + Dh + Dy * Dh + Dy  # = 172 generated weights

    key = jax.random.PRNGKey(0)
    ks = jax.random.split(key, 10)

    def lin_init(kw, kb, fan_out, fan_in):
        w = jax.random.normal(kw, (fan_out, fan_in), jnp.float32) / jnp.sqrt(fan_in)
        b = jax.random.normal(kb, (1, fan_out), jnp.float32) * 0.1
        return w, b

    w0, b0 = lin_init(ks[0], ks[1], H1, F)
    w1, b1 = lin_init(ks[2], ks[3], H2, H1)
    w2, b2 = lin_init(ks[4], ks[5], NW, H2)
    hyper_params = (w0, b0, w1, b1, w2, b2)

    # Tolerance note: the XLA reference uses TPU default matmul precision (bf16
    # passes for f32), while the in-kernel MXU path may differ in pass count, so we
    # compare at 2e-2/5e-2 — real layout/indexing bugs produce O(1) errors.
    rtol, atol = 2e-2, 5e-2

    # case 1: tiny batch (single grid step)
    feat = jax.random.normal(ks[6], (B, F), jnp.float32)
    x = jax.random.normal(ks[7], (B, Dx), jnp.float32)
    y = jax.block_until_ready(hypernet_forward(x, feat, hyper_params, (Dx, Dh, Dy)))
    y_ref = hypernet_reference(x, feat, hyper_params, (Dx, Dh, Dy))
    np.testing.assert_allclose(np.asarray(y), np.asarray(y_ref), rtol=rtol, atol=atol)

    # case 2: exercises batch padding + a 2-step "parallel" grid (v7x both-TC path)
    B2 = 20
    feat2 = jax.random.normal(ks[8], (B2, F), jnp.float32)
    x2 = jax.random.normal(ks[9], (B2, Dx), jnp.float32)
    y2 = jax.block_until_ready(hypernet_forward(x2, feat2, hyper_params, (Dx, Dh, Dy)))
    y2_ref = hypernet_reference(x2, feat2, hyper_params, (Dx, Dh, Dy))
    np.testing.assert_allclose(np.asarray(y2), np.asarray(y2_ref), rtol=rtol, atol=atol)

    print("KERNEL_OK")
</pallas_src>

<mosaic_0001>
module attributes {stable_mosaic.version = 11 : i64} {
  func.func @_hypernet_kernel(%arg0: i32, %arg1: memref<8x4xf32, #tpu.memory_space<vmem>>, %arg2: memref<8x16xf32, #tpu.memory_space<vmem>>, %arg3: memref<4x32xf32, #tpu.memory_space<vmem>>, %arg4: memref<1x32xf32, #tpu.memory_space<vmem>>, %arg5: memref<32x32xf32, #tpu.memory_space<vmem>>, %arg6: memref<1x32xf32, #tpu.memory_space<vmem>>, %arg7: memref<560x8xf32, #tpu.memory_space<vmem>>, %arg8: memref<1x8xf32, #tpu.memory_space<vmem>>, %arg9: memref<296x128xf32, #tpu.memory_space<vmem>>, %arg10: memref<1x128xf32, #tpu.memory_space<vmem>>, %arg11: memref<8x128xf32, #tpu.memory_space<vmem>>) attributes {dimension_semantics = [#tpu.dimension_semantics<parallel>], iteration_bounds = array<i64: 1>, scalar_prefetch = 0 : i64, scratch_operands = 0 : i64, tpu.core_type = #tpu.core_type<tc>, window_params = [{transform_indices = @transform_0, window_bounds = array<i64: 8, 4>}, {transform_indices = @transform_1, window_bounds = array<i64: 8, 16>}, {pipeline_mode = #tpu.pipeline_mode<synchronous>, transform_indices = @transform_2, window_bounds = array<i64: 4, 32>}, {pipeline_mode = #tpu.pipeline_mode<synchronous>, transform_indices = @transform_3, window_bounds = array<i64: 1, 32>}, {pipeline_mode = #tpu.pipeline_mode<synchronous>, transform_indices = @transform_4, window_bounds = array<i64: 32, 32>}, {pipeline_mode = #tpu.pipeline_mode<synchronous>, transform_indices = @transform_5, window_bounds = array<i64: 1, 32>}, {pipeline_mode = #tpu.pipeline_mode<synchronous>, transform_indices = @transform_6, window_bounds = array<i64: 560, 8>}, {pipeline_mode = #tpu.pipeline_mode<synchronous>, transform_indices = @transform_7, window_bounds = array<i64: 1, 8>}, {pipeline_mode = #tpu.pipeline_mode<synchronous>, transform_indices = @transform_8, window_bounds = array<i64: 296, 128>}, {pipeline_mode = #tpu.pipeline_mode<synchronous>, transform_indices = @transform_9, window_bounds = array<i64: 1, 128>}, {transform_indices = @transform_10, window_bounds = array<i64: 8, 128>}]} {
    %c0 = arith.constant 0 : index
    %c0_0 = arith.constant 0 : index
    %0 = vector.load %arg1[%c0, %c0_0] : memref<8x4xf32, #tpu.memory_space<vmem>>, vector<8x4xf32>
    %c0_1 = arith.constant 0 : index
    %c0_2 = arith.constant 0 : index
    %1 = vector.load %arg3[%c0_1, %c0_2] : memref<4x32xf32, #tpu.memory_space<vmem>>, vector<4x32xf32>
    %cst = arith.constant dense<0.000000e+00> : vector<8x32xf32>
    %2 = tpu.matmul %0, %1, %cst {dimension_numbers = #tpu.dot_dimension_numbers<[1], [0], [0], [1], [0, 0, 1, 1], [], []>} : vector<8x4xf32>, vector<4x32xf32>, vector<8x32xf32> -> vector<8x32xf32>
    %c0_3 = arith.constant 0 : index
    %c0_4 = arith.constant 0 : index
    %3 = vector.load %arg4[%c0_3, %c0_4] : memref<1x32xf32, #tpu.memory_space<vmem>>, vector<1x32xf32>
    %4 = vector.broadcast %3 : vector<1x32xf32> to vector<8x32xf32>
    %5 = arith.addf %2, %4 : vector<8x32xf32>
    %cst_5 = arith.constant 0.000000e+00 : f32
    %6 = vector.broadcast %cst_5 : f32 to vector<8x32xf32>
    %7 = arith.maximumf %5, %6 : vector<8x32xf32>
    %c0_6 = arith.constant 0 : index
    %c0_7 = arith.constant 0 : index
    %8 = vector.load %arg5[%c0_6, %c0_7] : memref<32x32xf32, #tpu.memory_space<vmem>>, vector<32x32xf32>
    %cst_8 = arith.constant dense<0.000000e+00> : vector<8x32xf32>
    %9 = tpu.matmul %7, %8, %cst_8 {dimension_numbers = #tpu.dot_dimension_numbers<[1], [0], [0], [1], [0, 0, 1, 1], [], []>} : vector<8x32xf32>, vector<32x32xf32>, vector<8x32xf32> -> vector<8x32xf32>
    %c0_9 = arith.constant 0 : index
    %c0_10 = arith.constant 0 : index
    %10 = vector.load %arg6[%c0_9, %c0_10] : memref<1x32xf32, #tpu.memory_space<vmem>>, vector<1x32xf32>
    %11 = vector.broadcast %10 : vector<1x32xf32> to vector<8x32xf32>
    %12 = arith.addf %9, %11 : vector<8x32xf32>
    %cst_11 = arith.constant 0.000000e+00 : f32
    %13 = vector.broadcast %cst_11 : f32 to vector<8x32xf32>
    %14 = arith.maximumf %12, %13 : vector<8x32xf32>
    %c0_12 = arith.constant 0 : index
    %c0_13 = arith.constant 0 : index
    %15 = vector.load %arg2[%c0_12, %c0_13] : memref<8x16xf32, #tpu.memory_space<vmem>>, vector<8x16xf32>
    %16 = vector.extract_strided_slice %15 {offsets = [0, 0], sizes = [8, 1], strides = [1, 1]} : vector<8x16xf32> to vector<8x1xf32>
    %17 = vector.broadcast %16 : vector<8x1xf32> to vector<8x32xf32>
    %18 = arith.mulf %17, %14 : vector<8x32xf32>
    %19 = vector.extract_strided_slice %15 {offsets = [0, 1], sizes = [8, 1], strides = [1, 1]} : vector<8x16xf32> to vector<8x1xf32>
    %20 = vector.broadcast %19 : vector<8x1xf32> to vector<8x32xf32>
    %21 = arith.mulf %20, %14 : vector<8x32xf32>
    %22 = vector.extract_strided_slice %15 {offsets = [0, 2], sizes = [8, 1], strides = [1, 1]} : vector<8x16xf32> to vector<8x1xf32>
    %23 = vector.broadcast %22 : vector<8x1xf32> to vector<8x32xf32>
    %24 = arith.mulf %23, %14 : vector<8x32xf32>
    %25 = vector.extract_strided_slice %15 {offsets = [0, 3], sizes = [8, 1], strides = [1, 1]} : vector<8x16xf32> to vector<8x1xf32>
    %26 = vector.broadcast %25 : vector<8x1xf32> to vector<8x32xf32>
    %27 = arith.mulf %26, %14 : vector<8x32xf32>
    %28 = vector.extract_strided_slice %15 {offsets = [0, 4], sizes = [8, 1], strides = [1, 1]} : vector<8x16xf32> to vector<8x1xf32>
    %29 = vector.broadcast %28 : vector<8x1xf32> to vector<8x32xf32>
    %30 = arith.mulf %29, %14 : vector<8x32xf32>
    %31 = vector.extract_strided_slice %15 {offsets = [0, 5], sizes = [8, 1], strides = [1, 1]} : vector<8x16xf32> to vector<8x1xf32>
    %32 = vector.broadcast %31 : vector<8x1xf32> to vector<8x32xf32>
    %33 = arith.mulf %32, %14 : vector<8x32xf32>
    %34 = vector.extract_strided_slice %15 {offsets = [0, 6], sizes = [8, 1], strides = [1, 1]} : vector<8x16xf32> to vector<8x1xf32>
    %35 = vector.broadcast %34 : vector<8x1xf32> to vector<8x32xf32>
    %36 = arith.mulf %35, %14 : vector<8x32xf32>
    %37 = vector.extract_strided_slice %15 {offsets = [0, 7], sizes = [8, 1], strides = [1, 1]} : vector<8x16xf32> to vector<8x1xf32>
    %38 = vector.broadcast %37 : vector<8x1xf32> to vector<8x32xf32>
    %39 = arith.mulf %38, %14 : vector<8x32xf32>
    %40 = vector.extract_strided_slice %15 {offsets = [0, 8], sizes = [8, 1], strides = [1, 1]} : vector<8x16xf32> to vector<8x1xf32>
    %41 = vector.broadcast %40 : vector<8x1xf32> to vector<8x32xf32>
    %42 = arith.mulf %41, %14 : vector<8x32xf32>
    %43 = vector.extract_strided_slice %15 {offsets = [0, 9], sizes = [8, 1], strides = [1, 1]} : vector<8x16xf32> to vector<8x1xf32>
    %44 = vector.broadcast %43 : vector<8x1xf32> to vector<8x32xf32>
    %45 = arith.mulf %44, %14 : vector<8x32xf32>
    %46 = vector.extract_strided_slice %15 {offsets = [0, 10], sizes = [8, 1], strides = [1, 1]} : vector<8x16xf32> to vector<8x1xf32>
    %47 = vector.broadcast %46 : vector<8x1xf32> to vector<8x32xf32>
    %48 = arith.mulf %47, %14 : vector<8x32xf32>
    %49 = vector.extract_strided_slice %15 {offsets = [0, 11], sizes = [8, 1], strides = [1, 1]} : vector<8x16xf32> to vector<8x1xf32>
    %50 = vector.broadcast %49 : vector<8x1xf32> to vector<8x32xf32>
    %51 = arith.mulf %50, %14 : vector<8x32xf32>
    %52 = vector.extract_strided_slice %15 {offsets = [0, 12], sizes = [8, 1], strides = [1, 1]} : vector<8x16xf32> to vector<8x1xf32>
    %53 = vector.broadcast %52 : vector<8x1xf32> to vector<8x32xf32>
    %54 = arith.mulf %53, %14 : vector<8x32xf32>
    %55 = vector.extract_strided_slice %15 {offsets = [0, 13], sizes = [8, 1], strides = [1, 1]} : vector<8x16xf32> to vector<8x1xf32>
    %56 = vector.broadcast %55 : vector<8x1xf32> to vector<8x32xf32>
    %57 = arith.mulf %56, %14 : vector<8x32xf32>
    %58 = vector.extract_strided_slice %15 {offsets = [0, 14], sizes = [8, 1], strides = [1, 1]} : vector<8x16xf32> to vector<8x1xf32>
    %59 = vector.broadcast %58 : vector<8x1xf32> to vector<8x32xf32>
    %60 = arith.mulf %59, %14 : vector<8x32xf32>
    %61 = vector.extract_strided_slice %15 {offsets = [0, 15], sizes = [8, 1], strides = [1, 1]} : vector<8x16xf32> to vector<8x1xf32>
    %62 = vector.broadcast %61 : vector<8x1xf32> to vector<8x32xf32>
    %63 = arith.mulf %62, %14 : vector<8x32xf32>
    %64 = tpu.concatenate %18, %21, %24, %27, %30, %33, %36, %39, %42, %45, %48, %51, %54, %57, %60, %63 in 1 : vector<8x32xf32>, vector<8x32xf32>, vector<8x32xf32>, vector<8x32xf32>, vector<8x32xf32>, vector<8x32xf32>, vector<8x32xf32>, vector<8x32xf32>, vector<8x32xf32>, vector<8x32xf32>, vector<8x32xf32>, vector<8x32xf32>, vector<8x32xf32>, vector<8x32xf32>, vector<8x32xf32>, vector<8x32xf32> -> vector<8x512xf32>
    %65 = tpu.concatenate %15, %14 in 1 : vector<8x16xf32>, vector<8x32xf32> -> vector<8x48xf32>
    %66 = tpu.concatenate %64, %65 in 1 : vector<8x512xf32>, vector<8x48xf32> -> vector<8x560xf32>
    %c0_14 = arith.constant 0 : index
    %c0_15 = arith.constant 0 : index
    %67 = vector.load %arg7[%c0_14, %c0_15] : memref<560x8xf32, #tpu.memory_space<vmem>>, vector<560x8xf32>
    %cst_16 = arith.constant dense<0.000000e+00> : vector<8x8xf32>
    %68 = tpu.matmul %66, %67, %cst_16 {dimension_numbers = #tpu.dot_dimension_numbers<[1], [0], [0], [1], [0, 0, 1, 1], [], []>} : vector<8x560xf32>, vector<560x8xf32>, vector<8x8xf32> -> vector<8x8xf32>
    %c0_17 = arith.constant 0 : index
    %c0_18 = arith.constant 0 : index
    %69 = vector.load %arg8[%c0_17, %c0_18] : memref<1x8xf32, #tpu.memory_space<vmem>>, vector<1x8xf32>
    %70 = vector.broadcast %69 : vector<1x8xf32> to vector<8x8xf32>
    %71 = arith.addf %68, %70 : vector<8x8xf32>
    %cst_19 = arith.constant 0.000000e+00 : f32
    %72 = vector.broadcast %cst_19 : f32 to vector<8x8xf32>
    %73 = arith.maximumf %71, %72 : vector<8x8xf32>
    %74 = vector.extract_strided_slice %73 {offsets = [0, 0], sizes = [8, 1], strides = [1, 1]} : vector<8x8xf32> to vector<8x1xf32>
    %75 = vector.broadcast %74 : vector<8x1xf32> to vector<8x32xf32>
    %76 = arith.mulf %75, %14 : vector<8x32xf32>
    %77 = vector.extract_strided_slice %73 {offsets = [0, 1], sizes = [8, 1], strides = [1, 1]} : vector<8x8xf32> to vector<8x1xf32>
    %78 = vector.broadcast %77 : vector<8x1xf32> to vector<8x32xf32>
    %79 = arith.mulf %78, %14 : vector<8x32xf32>
    %80 = vector.extract_strided_slice %73 {offsets = [0, 2], sizes = [8, 1], strides = [1, 1]} : vector<8x8xf32> to vector<8x1xf32>
    %81 = vector.broadcast %80 : vector<8x1xf32> to vector<8x32xf32>
    %82 = arith.mulf %81, %14 : vector<8x32xf32>
    %83 = vector.extract_strided_slice %73 {offsets = [0, 3], sizes = [8, 1], strides = [1, 1]} : vector<8x8xf32> to vector<8x1xf32>
    %84 = vector.broadcast %83 : vector<8x1xf32> to vector<8x32xf32>
    %85 = arith.mulf %84, %14 : vector<8x32xf32>
    %86 = vector.extract_strided_slice %73 {offsets = [0, 4], sizes = [8, 1], strides = [1, 1]} : vector<8x8xf32> to vector<8x1xf32>
    %87 = vector.broadcast %86 : vector<8x1xf32> to vector<8x32xf32>
    %88 = arith.mulf %87, %14 : vector<8x32xf32>
    %89 = vector.extract_strided_slice %73 {offsets = [0, 5], sizes = [8, 1], strides = [1, 1]} : vector<8x8xf32> to vector<8x1xf32>
    %90 = vector.broadcast %89 : vector<8x1xf32> to vector<8x32xf32>
    %91 = arith.mulf %90, %14 : vector<8x32xf32>
    %92 = vector.extract_strided_slice %73 {offsets = [0, 6], sizes = [8, 1], strides = [1, 1]} : vector<8x8xf32> to vector<8x1xf32>
    %93 = vector.broadcast %92 : vector<8x1xf32> to vector<8x32xf32>
    %94 = arith.mulf %93, %14 : vector<8x32xf32>
    %95 = vector.extract_strided_slice %73 {offsets = [0, 7], sizes = [8, 1], strides = [1, 1]} : vector<8x8xf32> to vector<8x1xf32>
    %96 = vector.broadcast %95 : vector<8x1xf32> to vector<8x32xf32>
    %97 = arith.mulf %96, %14 : vector<8x32xf32>
    %98 = tpu.concatenate %76, %79, %82, %85, %88, %91, %94, %97, %73, %14 in 1 : vector<8x32xf32>, vector<8x32xf32>, vector<8x32xf32>, vector<8x32xf32>, vector<8x32xf32>, vector<8x32xf32>, vector<8x32xf32>, vector<8x32xf32>, vector<8x8xf32>, vector<8x32xf32> -> vector<8x296xf32>
    %c0_20 = arith.constant 0 : index
    %c0_21 = arith.constant 0 : index
    %99 = vector.load %arg9[%c0_20, %c0_21] : memref<296x128xf32, #tpu.memory_space<vmem>>, vector<296x128xf32>
    %cst_22 = arith.constant dense<0.000000e+00> : vector<8x128xf32>
    %100 = tpu.matmul %98, %99, %cst_22 {dimension_numbers = #tpu.dot_dimension_numbers<[1], [0], [0], [1], [0, 0, 1, 1], [], []>} : vector<8x296xf32>, vector<296x128xf32>, vector<8x128xf32> -> vector<8x128xf32>
    %c0_23 = arith.constant 0 : index
    %c0_24 = arith.constant 0 : index
    %101 = vector.load %arg10[%c0_23, %c0_24] : memref<1x128xf32, #tpu.memory_space<vmem>>, vector<1x128xf32>
    %102 = vector.broadcast %101 : vector<1x128xf32> to vector<8x128xf32>
    %103 = arith.addf %100, %102 : vector<8x128xf32>
    %c0_25 = arith.constant 0 : index
    %c0_26 = arith.constant 0 : index
    %104 = vector.load %arg11[%c0_25, %c0_26] : memref<8x128xf32, #tpu.memory_space<vmem>>, vector<8x128xf32>
    tpu.vector_store %arg11[%c0_25, %c0_26], %103 {strides = array<i32>} : memref<8x128xf32, #tpu.memory_space<vmem>>, vector<8x128xf32>,
    return
  }
  func.func @transform_0(%arg0: i32) -> (i32, i32) {
    %c0_i32 = arith.constant 0 : i32
    %c0_i32_0 = arith.constant 0 : i32
    return %arg0, %c0_i32 : i32, i32
  }
  func.func @transform_1(%arg0: i32) -> (i32, i32) {
    %c0_i32 = arith.constant 0 : i32
    %c0_i32_0 = arith.constant 0 : i32
    return %arg0, %c0_i32 : i32, i32
  }
  func.func @transform_2(%arg0: i32) -> (i32, i32) {
    %c0_i32 = arith.constant 0 : i32
    %c0_i32_0 = arith.constant 0 : i32
    %c0_i32_1 = arith.constant 0 : i32
    return %c0_i32, %c0_i32_0 : i32, i32
  }
  func.func @transform_3(%arg0: i32) -> (i32, i32) {
    %c0_i32 = arith.constant 0 : i32
    %c0_i32_0 = arith.constant 0 : i32
    %c0_i32_1 = arith.constant 0 : i32
    return %c0_i32, %c0_i32_0 : i32, i32
  }
  func.func @transform_4(%arg0: i32) -> (i32, i32) {
    %c0_i32 = arith.constant 0 : i32
    %c0_i32_0 = arith.constant 0 : i32
    %c0_i32_1 = arith.constant 0 : i32
    return %c0_i32, %c0_i32_0 : i32, i32
  }
  func.func @transform_5(%arg0: i32) -> (i32, i32) {
    %c0_i32 = arith.constant 0 : i32
    %c0_i32_0 = arith.constant 0 : i32
    %c0_i32_1 = arith.constant 0 : i32
    return %c0_i32, %c0_i32_0 : i32, i32
  }
  func.func @transform_6(%arg0: i32) -> (i32, i32) {
    %c0_i32 = arith.constant 0 : i32
    %c0_i32_0 = arith.constant 0 : i32
    %c0_i32_1 = arith.constant 0 : i32
    return %c0_i32, %c0_i32_0 : i32, i32
  }
  func.func @transform_7(%arg0: i32) -> (i32, i32) {
    %c0_i32 = arith.constant 0 : i32
    %c0_i32_0 = arith.constant 0 : i32
    %c0_i32_1 = arith.constant 0 : i32
    return %c0_i32, %c0_i32_0 : i32, i32
  }
  func.func @transform_8(%arg0: i32) -> (i32, i32) {
    %c0_i32 = arith.constant 0 : i32
    %c0_i32_0 = arith.constant 0 : i32
    %c0_i32_1 = arith.constant 0 : i32
    return %c0_i32, %c0_i32_0 : i32, i32
  }
  func.func @transform_9(%arg0: i32) -> (i32, i32) {
    %c0_i32 = arith.constant 0 : i32
    %c0_i32_0 = arith.constant 0 : i32
    %c0_i32_1 = arith.constant 0 : i32
    return %c0_i32, %c0_i32_0 : i32, i32
  }
  func.func @transform_10(%arg0: i32) -> (i32, i32) {
    %c0_i32 = arith.constant 0 : i32
    %c0_i32_0 = arith.constant 0 : i32
    return %arg0, %c0_i32 : i32, i32
  }
}

</mosaic_0001>

<llo_original>
// kernel: tpu_custom_call.1
$region0: #{tpu_custom_call.1}
  #allocation0 [shape = 'u32[]', space=smem, size = 0x4, offset = 0x4, fixed_abs, tag = 'smem constant byte address 0x4 - core index']
  #allocation1 [shape = 'u32[72,128]{1,0:T(1,128)}', space=vmem, size = 0x9000, scoped, tag = 'internal scratch']
  %s0 = inlined_call_operand.vmem [shape: f32[8,4], index: 0, kind: input, shape index: {}]
  %s1 = inlined_call_operand.vmem [shape: f32[8,16], index: 1, kind: input, shape index: {}]
  %s2 = inlined_call_operand.vmem [shape: f32[4,32], index: 2, kind: input, shape index: {}]
  %s3 = inlined_call_operand.vmem [shape: f32[1,32], index: 3, kind: input, shape index: {}]
  %s4 = inlined_call_operand.vmem [shape: f32[32,32], index: 4, kind: input, shape index: {}]
  %s5 = inlined_call_operand.vmem [shape: f32[1,32], index: 5, kind: input, shape index: {}]
  %s6 = inlined_call_operand.vmem [shape: f32[560,8], index: 6, kind: input, shape index: {}]
  %s7 = inlined_call_operand.vmem [shape: f32[1,8], index: 7, kind: input, shape index: {}]
  %s8 = inlined_call_operand.vmem [shape: f32[296,128], index: 8, kind: input, shape index: {}]
  %s9 = inlined_call_operand.vmem [shape: f32[1,128], index: 9, kind: input, shape index: {}]
  %s10 = inlined_call_operand.hbm [shape: f32[8,128], index: 10, kind: output, shape index: {}]
  %s11 = sld [smem:[#allocation0]]
  $region50: #{tpu_custom_call.1} parent=0
    _
  %s13 = ssub.s32 1, %s11
  %s14 = scalar_select 0, %s13, %s11
  $region1: #{tpu_custom_call.1} parent=0
    #allocation2 [shape = 'u8[4096]{0}', space=vmem, size = 0x1000, scoped, tag = 'output window, operand 0, single buffered']
    #allocation3 [shape = 's32[1]{0}', space=sflag, size = 0x4, scoped, tag = 'scoped memory for tpu_custom_call.1']
    %15 = vsyncpa [#allocation3], 0
    // Predicated region
    $region2: #{tpu_custom_call.1} parent=1 // pred_check
      _
    $region3: #{tpu_custom_call.1} parent=1 // pred_check_branch
      %17 = sbr.rel (0) target = $region5
    $region4: #{tpu_custom_call.1} parent=1 // pred_region
      _
    $region5: #{tpu_custom_call.1} parent=1 // pred_fallthru
      _
    // Predicated region
    $region6: #{tpu_custom_call.1} parent=1 // pred_check
      _
    $region7: #{tpu_custom_call.1} parent=1 // pred_check_branch
      %19 = sbr.rel (0) target = $region9
    $region8: #{tpu_custom_call.1} parent=1 // pred_region
      _
    $region9: #{tpu_custom_call.1} parent=1 // pred_fallthru
      _
    // Predicated region
    $region10: #{tpu_custom_call.1} parent=1 // pred_check
      _
    $region11: #{tpu_custom_call.1} parent=1 // pred_check_branch
      %21 = sbr.rel (0) target = $region13
    $region12: #{tpu_custom_call.1} parent=1 // pred_region
      _
    $region13: #{tpu_custom_call.1} parent=1 // pred_fallthru
      _
    // Predicated region
    $region14: #{tpu_custom_call.1} parent=1 // pred_check
      _
    $region15: #{tpu_custom_call.1} parent=1 // pred_check_branch
      %23 = sbr.rel (0) target = $region17
    $region16: #{tpu_custom_call.1} parent=1 // pred_region
      _
    $region17: #{tpu_custom_call.1} parent=1 // pred_fallthru
      _
    // Predicated region
    $region18: #{tpu_custom_call.1} parent=1 // pred_check
      _
    $region19: #{tpu_custom_call.1} parent=1 // pred_check_branch
      %25 = sbr.rel (0) target = $region21
    $region20: #{tpu_custom_call.1} parent=1 // pred_region
      _
    $region21: #{tpu_custom_call.1} parent=1 // pred_fallthru
      _
    // Predicated region
    $region22: #{tpu_custom_call.1} parent=1 // pred_check
      _
    $region23: #{tpu_custom_call.1} parent=1 // pred_check_branch
      %27 = sbr.rel (0) target = $region25
    $region24: #{tpu_custom_call.1} parent=1 // pred_region
      _
    $region25: #{tpu_custom_call.1} parent=1 // pred_fallthru
      _
    // Predicated region
    $region26: #{tpu_custom_call.1} parent=1 // pred_check
      _
    $region27: #{tpu_custom_call.1} parent=1 // pred_check_branch
      %29 = sbr.rel (0) target = $region29
    $region28: #{tpu_custom_call.1} parent=1 // pred_region
      _
    $region29: #{tpu_custom_call.1} parent=1 // pred_fallthru
      _
    // Predicated region
    $region30: #{tpu_custom_call.1} parent=1 // pred_check
      _
    $region31: #{tpu_custom_call.1} parent=1 // pred_check_branch
      %31 = sbr.rel (0) target = $region33
    $region32: #{tpu_custom_call.1} parent=1 // pred_region
      _
    $region33: #{tpu_custom_call.1} parent=1 // pred_fallthru
      _
    // Predicated region
    $region34: #{tpu_custom_call.1} parent=1 // pred_check
      _
    $region35: #{tpu_custom_call.1} parent=1 // pred_check_branch
      %33 = sbr.rel (0) target = $region37
    $region36: #{tpu_custom_call.1} parent=1 // pred_region
      _
    $region37: #{tpu_custom_call.1} parent=1 // pred_fallthru
      _
    // Predicated region
    $region38: #{tpu_custom_call.1} parent=1 // pred_check
      _
    $region39: #{tpu_custom_call.1} parent=1 // pred_check_branch
      %35 = sbr.rel (0) target = $region41
    $region40: #{tpu_custom_call.1} parent=1 // pred_region
      _
    $region41: #{tpu_custom_call.1} parent=1 // pred_fallthru
      _
    %v36 = vld [vmem:[%s0] sm:$0xff]
    %v37 = vld [vmem:[%s2] sm:$0xf]
    %v38 = vld [vmem:[%s3] sm:$0x1]
    %v40 = vperm.slane %v38, 0
    %vm42 = vcmask 31744
    %v44 = vsel %vm42, %v36, 0
    %vm46 = vcmask 1043456
    %v48 = vsel %vm46, %v37, 0
    %50 = vmatpush.msra.mxu0 0.0
    %51 = vmatpush.msra.mxu0 0.0
    %52 = vmatpush.msra.mxu0 0.0
    %53 = vmatpush.msra.mxu0 0.0
    %54 = vmatpush.msra.mxu0 0.0
    %55 = vmatpush.msra.mxu0 0.0
    %56 = vmatpush.msra.mxu0 0.0
    %57 = vmatpush.msra.mxu0 0.0
    %58 = vmatpush.msra.mxu0 0.0
    %59 = vmatpush.msra.mxu0 0.0
    %60 = vmatpush.msra.mxu0 0.0
    %61 = vmatpush.msra.mxu0 0.0
    %62 = vmatpush.msra.mxu0 0.0
    %63 = vmatpush.msra.mxu0 0.0
    %64 = vmatpush.msra.mxu0 0.0
    %65 = vmatpush.msra.mxu0 %v48
    %66 = vmatmul.f32.gmra.mxu0 %v44
    %v67 = vpop.f32.mrf.mxu0
    %v68 = vadd.f32 %v40, %v67
    %69 = vdwg.mxu0
    %v70 = vmax.f32 %v68, 0.0
    %v71 = vld [vmem:[%s4] sm:$0xff]
    %v72 = vld [vmem:[%s4 + $0x8] sm:$0xff]
    %v73 = vld [vmem:[%s4 + $0x10] sm:$0xff]
    %v74 = vld [vmem:[%s4 + $0x18] sm:$0xff]
    %v75 = vld [vmem:[%s5] sm:$0x1]
    %v77 = vperm.slane %v75, 0
    %vm79 = vcmask 261120
    %v81 = vsel %vm79, %v70, 0
    %83 = vmatpush.msra.mxu0 0.0
    %84 = vmatpush.msra.mxu0 0.0
    %85 = vmatpush.msra.mxu0 0.0
    %86 = vmatpush.msra.mxu0 0.0
    %87 = vmatpush.msra.mxu0 0.0
    %88 = vmatpush.msra.mxu0 0.0
    %89 = vmatpush.msra.mxu0 0.0
    %90 = vmatpush.msra.mxu0 0.0
    %91 = vmatpush.msra.mxu0 0.0
    %92 = vmatpush.msra.mxu0 0.0
    %93 = vmatpush.msra.mxu0 0.0
    %94 = vmatpush.msra.mxu0 0.0
    %95 = vmatpush.msra.mxu0 %v74
    %96 = vmatpush.msra.mxu0 %v73
    %97 = vmatpush.msra.mxu0 %v72
    %98 = vmatpush.msra.mxu0 %v71
    %99 = vmatmul.f32.gmra.mxu0 %v81
    %v100 = vpop.f32.mrf.mxu0
    %v101 = vadd.f32 %v77, %v100
    %102 = vdwg.mxu0
    %v103 = vmax.f32 %v101, 0.0
    %v104 = vld [vmem:[%s1] sm:$0xff]
    %106 = vset.pattern.permute.xlu0 0
    %107 = vperm.xlu0 %106, %v104
    %v108 = vpop.permute.xlu0 %107
    %v110 = vmul.f32 %v108, %v103
    %111 = vset.pattern.permute.xlu0 1
    %112 = vperm.xlu0 %111, %v104
    %v113 = vpop.permute.xlu0 %112
    %v115 = vmul.f32 %v113, %v103
    %116 = vset.pattern.permute.xlu0 2
    %117 = vperm.xlu0 %116, %v104
    %v118 = vpop.permute.xlu0 %117
    %v120 = vmul.f32 %v118, %v103
    %121 = vset.pattern.permute.xlu0 3
    %122 = vperm.xlu0 %121, %v104
    %v123 = vpop.permute.xlu0 %122
    %v125 = vmul.f32 %v123, %v103
    %126 = vset.pattern.permute.xlu0 4
    %127 = vperm.xlu0 %126, %v104
    %v128 = vpop.permute.xlu0 %127
    %v130 = vmul.f32 %v128, %v103
    %131 = vset.pattern.permute.xlu0 5
    %132 = vperm.xlu0 %131, %v104
    %v133 = vpop.permute.xlu0 %132
    %v135 = vmul.f32 %v133, %v103
    %136 = vset.pattern.permute.xlu0 6
    %137 = vperm.xlu0 %136, %v104
    %v138 = vpop.permute.xlu0 %137
    %v140 = vmul.f32 %v138, %v103
    %141 = vset.pattern.permute.xlu0 7
    %142 = vperm.xlu0 %141, %v104
    %v143 = vpop.permute.xlu0 %142
    %v145 = vmul.f32 %v143, %v103
    %146 = vset.pattern.permute.xlu0 8
    %147 = vperm.xlu0 %146, %v104
    %v148 = vpop.permute.xlu0 %147
    %v150 = vmul.f32 %v148, %v103
    %151 = vset.pattern.permute.xlu0 9
    %152 = vperm.xlu0 %151, %v104
    %v153 = vpop.permute.xlu0 %152
    %v155 = vmul.f32 %v153, %v103
    %156 = vset.pattern.permute.xlu0 10
    %157 = vperm.xlu0 %156, %v104
    %v158 = vpop.permute.xlu0 %157
    %v160 = vmul.f32 %v158, %v103
    %161 = vset.pattern.permute.xlu0 11
    %162 = vperm.xlu0 %161, %v104
    %v163 = vpop.permute.xlu0 %162
    %v165 = vmul.f32 %v163, %v103
    %166 = vset.pattern.permute.xlu0 12
    %167 = vperm.xlu0 %166, %v104
    %v168 = vpop.permute.xlu0 %167
    %v170 = vmul.f32 %v168, %v103
    %171 = vset.pattern.permute.xlu0 13
    %172 = vperm.xlu0 %171, %v104
    %v173 = vpop.permute.xlu0 %172
    %v175 = vmul.f32 %v173, %v103
    %176 = vset.pattern.permute.xlu0 14
    %177 = vperm.xlu0 %176, %v104
    %v178 = vpop.permute.xlu0 %177
    %v180 = vmul.f32 %v178, %v103
    %181 = vset.pattern.permute.xlu0 15
    %182 = vperm.xlu0 %181, %v104
    %v183 = vpop.permute.xlu0 %182
    %v185 = vmul.f32 %v183, %v103
    %187 = vrot.lane.b32.xlu0 %v115, 32
    %v188 = vpop.permute.xlu0 %187
    %191 = vrot.lane.b32.xlu0 %v120, 64
    %v192 = vpop.permute.xlu0 %191
    %195 = vrot.lane.b32.xlu0 %v125, 96
    %v196 = vpop.permute.xlu0 %195
    %199 = vrot.lane.b32.xlu0 %v135, 32
    %v200 = vpop.permute.xlu0 %199
    %203 = vrot.lane.b32.xlu0 %v140, 64
    %v204 = vpop.permute.xlu0 %203
    %207 = vrot.lane.b32.xlu0 %v145, 96
    %v208 = vpop.permute.xlu0 %207
    %211 = vrot.lane.b32.xlu0 %v155, 32
    %v212 = vpop.permute.xlu0 %211
    %215 = vrot.lane.b32.xlu0 %v160, 64
    %v216 = vpop.permute.xlu0 %215
    %219 = vrot.lane.b32.xlu0 %v165, 96
    %v220 = vpop.permute.xlu0 %219
    %223 = vrot.lane.b32.xlu0 %v175, 32
    %v224 = vpop.permute.xlu0 %223
    %227 = vrot.lane.b32.xlu0 %v180, 64
    %v228 = vpop.permute.xlu0 %227
    %231 = vrot.lane.b32.xlu0 %v185, 96
    %v232 = vpop.permute.xlu0 %231
    %v234 = vsel %vm79, %v110, %v188
    %vm235 = vcmask 523264
    %v236 = vsel %vm235, %v234, %v192
    %vm237 = vcmask 785408
    %v238 = vsel %vm237, %v236, %v196
    %v239 = vsel %vm79, %v130, %v200
    %v240 = vsel %vm235, %v239, %v204
    %v241 = vsel %vm237, %v240, %v208
    %v242 = vsel %vm79, %v150, %v212
    %v243 = vsel %vm235, %v242, %v216
    %v244 = vsel %vm237, %v243, %v220
    %v245 = vsel %vm79, %v170, %v224
    %v246 = vsel %vm235, %v245, %v228
    %v247 = vsel %vm237, %v246, %v232
    %249 = vrot.lane.b32.xlu0 %v103, 16
    %v250 = vpop.permute.xlu0 %249
    %vm252 = vcmask 130048
    %v253 = vsel %vm252, %v104, %v250
    %v254 = vld [vmem:[%s6] sm:$0xff]
    %v255 = vld [vmem:[%s6 + $0x8] sm:$0xff]
    %v256 = vld [vmem:[%s6 + $0x10] sm:$0xff]
    %v257 = vld [vmem:[%s6 + $0x18] sm:$0xff]
    %v258 = vld [vmem:[%s6 + $0x20] sm:$0xff]
    %v259 = vld [vmem:[%s6 + $0x28] sm:$0xff]
    %v260 = vld [vmem:[%s6 + $0x30] sm:$0xff]
    %v261 = vld [vmem:[%s6 + $0x38] sm:$0xff]
    %v262 = vld [vmem:[%s6 + $0x40] sm:$0xff]
    %v263 = vld [vmem:[%s6 + $0x48] sm:$0xff]
    %v264 = vld [vmem:[%s6 + $0x50] sm:$0xff]
    %v265 = vld [vmem:[%s6 + $0x58] sm:$0xff]
    %v266 = vld [vmem:[%s6 + $0x60] sm:$0xff]
    %v267 = vld [vmem:[%s6 + $0x68] sm:$0xff]
    %v268 = vld [vmem:[%s6 + $0x70] sm:$0xff]
    %v269 = vld [vmem:[%s6 + $0x78] sm:$0xff]
    %v270 = vld [vmem:[%s6 + $0x80] sm:$0xff]
    %v271 = vld [vmem:[%s6 + $0x88] sm:$0xff]
    %v272 = vld [vmem:[%s6 + $0x90] sm:$0xff]
    %v273 = vld [vmem:[%s6 + $0x98] sm:$0xff]
    %v274 = vld [vmem:[%s6 + $0xa0] sm:$0xff]
    %v275 = vld [vmem:[%s6 + $0xa8] sm:$0xff]
    %v276 = vld [vmem:[%s6 + $0xb0] sm:$0xff]
    %v277 = vld [vmem:[%s6 + $0xb8] sm:$0xff]
    %v278 = vld [vmem:[%s6 + $0xc0] sm:$0xff]
    %v279 = vld [vmem:[%s6 + $0xc8] sm:$0xff]
    %v280 = vld [vmem:[%s6 + $0xd0] sm:$0xff]
    %v281 = vld [vmem:[%s6 + $0xd8] sm:$0xff]
    %v282 = vld [vmem:[%s6 + $0xe0] sm:$0xff]
    %v283 = vld [vmem:[%s6 + $0xe8] sm:$0xff]
    %v284 = vld [vmem:[%s6 + $0xf0] sm:$0xff]
    %v285 = vld [vmem:[%s6 + $0xf8] sm:$0xff]
    %v286 = vld [vmem:[%s6 + $0x100] sm:$0xff]
    %v287 = vld [vmem:[%s6 + $0x108] sm:$0xff]
    %v288 = vld [vmem:[%s6 + $0x110] sm:$0xff]
    %v289 = vld [vmem:[%s6 + $0x118] sm:$0xff]
    %v290 = vld [vmem:[%s6 + $0x120] sm:$0xff]
    %v291 = vld [vmem:[%s6 + $0x128] sm:$0xff]
    %v292 = vld [vmem:[%s6 + $0x130] sm:$0xff]
    %v293 = vld [vmem:[%s6 + $0x138] sm:$0xff]
    %v294 = vld [vmem:[%s6 + $0x140] sm:$0xff]
    %v295 = vld [vmem:[%s6 + $0x148] sm:$0xff]
    %v296 = vld [vmem:[%s6 + $0x150] sm:$0xff]
    %v297 = vld [vmem:[%s6 + $0x158] sm:$0xff]
    %v298 = vld [vmem:[%s6 + $0x160] sm:$0xff]
    %v299 = vld [vmem:[%s6 + $0x168] sm:$0xff]
    %v300 = vld [vmem:[%s6 + $0x170] sm:$0xff]
    %v301 = vld [vmem:[%s6 + $0x178] sm:$0xff]
    %v302 = vld [vmem:[%s6 + $0x180] sm:$0xff]
    %v303 = vld [vmem:[%s6 + $0x188] sm:$0xff]
    %v304 = vld [vmem:[%s6 + $0x190] sm:$0xff]
    %v305 = vld [vmem:[%s6 + $0x198] sm:$0xff]
    %v306 = vld [vmem:[%s6 + $0x1a0] sm:$0xff]
    %v307 = vld [vmem:[%s6 + $0x1a8] sm:$0xff]
    %v308 = vld [vmem:[%s6 + $0x1b0] sm:$0xff]
    %v309 = vld [vmem:[%s6 + $0x1b8] sm:$0xff]
    %v310 = vld [vmem:[%s6 + $0x1c0] sm:$0xff]
    %v311 = vld [vmem:[%s6 + $0x1c8] sm:$0xff]
    %v312 = vld [vmem:[%s6 + $0x1d0] sm:$0xff]
    %v313 = vld [vmem:[%s6 + $0x1d8] sm:$0xff]
    %v314 = vld [vmem:[%s6 + $0x1e0] sm:$0xff]
    %v315 = vld [vmem:[%s6 + $0x1e8] sm:$0xff]
    %v316 = vld [vmem:[%s6 + $0x1f0] sm:$0xff]
    %v317 = vld [vmem:[%s6 + $0x1f8] sm:$0xff]
    %v318 = vld [vmem:[%s6 + $0x200] sm:$0xff]
    %v319 = vld [vmem:[%s6 + $0x208] sm:$0xff]
    %v320 = vld [vmem:[%s6 + $0x210] sm:$0xff]
    %v321 = vld [vmem:[%s6 + $0x218] sm:$0xff]
    %v322 = vld [vmem:[%s6 + $0x220] sm:$0xff]
    %v323 = vld [vmem:[%s6 + $0x228] sm:$0xff]
    %v324 = vld [vmem:[%s7] sm:$0x1]
    %v326 = vperm.slane %v324, 0
    %vm328 = vcmask 392192
    %v330 = vsel %vm328, %v253, 0
    %332 = vmatpush.msra.mxu0 %v269
    %333 = vmatpush.msra.mxu0 %v268
    %334 = vmatpush.msra.mxu0 %v267
    %335 = vmatpush.msra.mxu0 %v266
    %336 = vmatpush.msra.mxu0 %v265
    %337 = vmatpush.msra.mxu0 %v264
    %338 = vmatpush.msra.mxu0 %v263
    %339 = vmatpush.msra.mxu0 %v262
    %340 = vmatpush.msra.mxu0 %v261
    %341 = vmatpush.msra.mxu0 %v260
    %342 = vmatpush.msra.mxu0 %v259
    %343 = vmatpush.msra.mxu0 %v258
    %344 = vmatpush.msra.mxu0 %v257
    %345 = vmatpush.msra.mxu0 %v256
    %346 = vmatpush.msra.mxu0 %v255
    %347 = vmatpush.msra.mxu0 %v254
    %348 = vmatmul.f32.gmra.mxu0 %v238
    %v349 = vpop.f32.mrf.mxu0
    %v350 = vadd.f32 %v326, %v349
    %351 = vdwg.mxu0
    %352 = vmatpush.msra.mxu0 %v285
    %353 = vmatpush.msra.mxu0 %v284
    %354 = vmatpush.msra.mxu0 %v283
    %355 = vmatpush.msra.mxu0 %v282
    %356 = vmatpush.msra.mxu0 %v281
    %357 = vmatpush.msra.mxu0 %v280
    %358 = vmatpush.msra.mxu0 %v279
    %359 = vmatpush.msra.mxu0 %v278
    %360 = vmatpush.msra.mxu0 %v277
    %361 = vmatpush.msra.mxu0 %v276
    %362 = vmatpush.msra.mxu0 %v275
    %363 = vmatpush.msra.mxu0 %v274
    %364 = vmatpush.msra.mxu0 %v273
    %365 = vmatpush.msra.mxu0 %v272
    %366 = vmatpush.msra.mxu0 %v271
    %367 = vmatpush.msra.mxu0 %v270
    %368 = vmatmul.f32.gmra.mxu0 %v241
    %v369 = vpop.f32.mrf.mxu0
    %v370 = vadd.f32 %v350, %v369
    %371 = vdwg.mxu0
    %372 = vmatpush.msra.mxu0 %v301
    %373 = vmatpush.msra.mxu0 %v300
    %374 = vmatpush.msra.mxu0 %v299
    %375 = vmatpush.msra.mxu0 %v298
    %376 = vmatpush.msra.mxu0 %v297
    %377 = vmatpush.msra.mxu0 %v296
    %378 = vmatpush.msra.mxu0 %v295
    %379 = vmatpush.msra.mxu0 %v294
    %380 = vmatpush.msra.mxu0 %v293
    %381 = vmatpush.msra.mxu0 %v292
    %382 = vmatpush.msra.mxu0 %v291
    %383 = vmatpush.msra.mxu0 %v290
    %384 = vmatpush.msra.mxu0 %v289
    %385 = vmatpush.msra.mxu0 %v288
    %386 = vmatpush.msra.mxu0 %v287
    %387 = vmatpush.msra.mxu0 %v286
    %388 = vmatmul.f32.gmra.mxu0 %v244
    %v389 = vpop.f32.mrf.mxu0
    %v390 = vadd.f32 %v370, %v389
    %391 = vdwg.mxu0
    %392 = vmatpush.msra.mxu0 %v317
    %393 = vmatpush.msra.mxu0 %v316
    %394 = vmatpush.msra.mxu0 %v315
    %395 = vmatpush.msra.mxu0 %v314
    %396 = vmatpush.msra.mxu0 %v313
    %397 = vmatpush.msra.mxu0 %v312
    %398 = vmatpush.msra.mxu0 %v311
    %399 = vmatpush.msra.mxu0 %v310
    %400 = vmatpush.msra.mxu0 %v309
    %401 = vmatpush.msra.mxu0 %v308
    %402 = vmatpush.msra.mxu0 %v307
    %403 = vmatpush.msra.mxu0 %v306
    %404 = vmatpush.msra.mxu0 %v305
    %405 = vmatpush.msra.mxu0 %v304
    %406 = vmatpush.msra.mxu0 %v303
    %407 = vmatpush.msra.mxu0 %v302
    %408 = vmatmul.f32.gmra.mxu0 %v247
    %v409 = vpop.f32.mrf.mxu0
    %v410 = vadd.f32 %v390, %v409
    %411 = vdwg.mxu0
    %412 = vmatpush.msra.mxu0 0.0
    %413 = vmatpush.msra.mxu0 0.0
    %414 = vmatpush.msra.mxu0 0.0
    %415 = vmatpush.msra.mxu0 0.0
    %416 = vmatpush.msra.mxu0 0.0
    %417 = vmatpush.msra.mxu0 0.0
    %418 = vmatpush.msra.mxu0 0.0
    %419 = vmatpush.msra.mxu0 0.0
    %420 = vmatpush.msra.mxu0 0.0
    %421 = vmatpush.msra.mxu0 0.0
    %422 = vmatpush.msra.mxu0 %v323
    %423 = vmatpush.msra.mxu0 %v322
    %424 = vmatpush.msra.mxu0 %v321
    %425 = vmatpush.msra.mxu0 %v320
    %426 = vmatpush.msra.mxu0 %v319
    %427 = vmatpush.msra.mxu0 %v318
    %428 = vmatmul.f32.gmra.mxu0 %v330
    %v429 = vpop.f32.mrf.mxu0
    %v430 = vadd.f32 %v410, %v429
    %431 = vdwg.mxu0
    %v432 = vmax.f32 %v430, 0.0
    %434 = vset.pattern.permute.xlu0 0
    %435 = vperm.xlu0 %434, %v432
    %v436 = vpop.permute.xlu0 %435
    %v438 = vmul.f32 %v436, %v103
    %439 = vset.pattern.permute.xlu0 1
    %440 = vperm.xlu0 %439, %v432
    %v441 = vpop.permute.xlu0 %440
    %v443 = vmul.f32 %v441, %v103
    %444 = vset.pattern.permute.xlu0 2
    %445 = vperm.xlu0 %444, %v432
    %v446 = vpop.permute.xlu0 %445
    %v448 = vmul.f32 %v446, %v103
    %449 = vset.pattern.permute.xlu0 3
    %450 = vperm.xlu0 %449, %v432
    %v451 = vpop.permute.xlu0 %450
    %v453 = vmul.f32 %v451, %v103
    %454 = vset.pattern.permute.xlu0 4
    %455 = vperm.xlu0 %454, %v432
    %v456 = vpop.permute.xlu0 %455
    %v458 = vmul.f32 %v456, %v103
    %459 = vset.pattern.permute.xlu0 5
    %460 = vperm.xlu0 %459, %v432
    %v461 = vpop.permute.xlu0 %460
    %v463 = vmul.f32 %v461, %v103
    %464 = vset.pattern.permute.xlu0 6
    %465 = vperm.xlu0 %464, %v432
    %v466 = vpop.permute.xlu0 %465
    %v468 = vmul.f32 %v466, %v103
    %469 = vset.pattern.permute.xlu0 7
    %470 = vperm.xlu0 %469, %v432
    %v471 = vpop.permute.xlu0 %470
    %v473 = vmul.f32 %v471, %v103
    %475 = vrot.lane.b32.xlu0 %v443, 32
    %v476 = vpop.permute.xlu0 %475
    %479 = vrot.lane.b32.xlu0 %v448, 64
    %v480 = vpop.permute.xlu0 %479
    %483 = vrot.lane.b32.xlu0 %v453, 96
    %v484 = vpop.permute.xlu0 %483
    %487 = vrot.lane.b32.xlu0 %v463, 32
    %v488 = vpop.permute.xlu0 %487
    %491 = vrot.lane.b32.xlu0 %v468, 64
    %v492 = vpop.permute.xlu0 %491
    %495 = vrot.lane.b32.xlu0 %v473, 96
    %v496 = vpop.permute.xlu0 %495
    %498 = vrot.lane.b32.xlu0 %v103, 8
    %v499 = vpop.permute.xlu0 %498
    %v501 = vsel %vm79, %v438, %v476
    %v502 = vsel %vm235, %v501, %v480
    %v503 = vsel %vm237, %v502, %v484
    %v504 = vsel %vm79, %v458, %v488
    %v505 = vsel %vm235, %v504, %v492
    %v506 = vsel %vm237, %v505, %v496
    %vm507 = vcmask 64512
    %v508 = vsel %vm507, %v432, %v499
    %v509 = vld [vmem:[%s8] sm:$0xff]
    %v510 = vld [vmem:[%s8 + $0x8] sm:$0xff]
    %v511 = vld [vmem:[%s8 + $0x10] sm:$0xff]
    %v512 = vld [vmem:[%s8 + $0x18] sm:$0xff]
    %v513 = vld [vmem:[%s8 + $0x20] sm:$0xff]
    %v514 = vld [vmem:[%s8 + $0x28] sm:$0xff]
    %v515 = vld [vmem:[%s8 + $0x30] sm:$0xff]
    %v516 = vld [vmem:[%s8 + $0x38] sm:$0xff]
    %v517 = vld [vmem:[%s8 + $0x40] sm:$0xff]
    %v518 = vld [vmem:[%s8 + $0x48] sm:$0xff]
    %v519 = vld [vmem:[%s8 + $0x50] sm:$0xff]
    %v520 = vld [vmem:[%s8 + $0x58] sm:$0xff]
    %v521 = vld [vmem:[%s8 + $0x60] sm:$0xff]
    %v522 = vld [vmem:[%s8 + $0x68] sm:$0xff]
    %v523 = vld [vmem:[%s8 + $0x70] sm:$0xff]
    %v524 = vld [vmem:[%s8 + $0x78] sm:$0xff]
    %v525 = vld [vmem:[%s8 + $0x80] sm:$0xff]
    %v526 = vld [vmem:[%s8 + $0x88] sm:$0xff]
    %v527 = vld [vmem:[%s8 + $0x90] sm:$0xff]
    %v528 = vld [vmem:[%s8 + $0x98] sm:$0xff]
    %v529 = vld [vmem:[%s8 + $0xa0] sm:$0xff]
    %v530 = vld [vmem:[%s8 + $0xa8] sm:$0xff]
    %v531 = vld [vmem:[%s8 + $0xb0] sm:$0xff]
    %v532 = vld [vmem:[%s8 + $0xb8] sm:$0xff]
    %v533 = vld [vmem:[%s8 + $0xc0] sm:$0xff]
    %v534 = vld [vmem:[%s8 + $0xc8] sm:$0xff]
    %v535 = vld [vmem:[%s8 + $0xd0] sm:$0xff]
    %v536 = vld [vmem:[%s8 + $0xd8] sm:$0xff]
    %v537 = vld [vmem:[%s8 + $0xe0] sm:$0xff]
    %v538 = vld [vmem:[%s8 + $0xe8] sm:$0xff]
    %v539 = vld [vmem:[%s8 + $0xf0] sm:$0xff]
    %v540 = vld [vmem:[%s8 + $0xf8] sm:$0xff]
    %v541 = vld [vmem:[%s8 + $0x100] sm:$0xff]
    %v542 = vld [vmem:[%s8 + $0x108] sm:$0xff]
    %v543 = vld [vmem:[%s8 + $0x110] sm:$0xff]
    %v544 = vld [vmem:[%s8 + $0x118] sm:$0xff]
    %v545 = vld [vmem:[%s8 + $0x120] sm:$0xff]
    %v546 = vld [vmem:[%s9] sm:$0x1]
    %v548 = vperm.slane %v546, 0
    %vm550 = vcmask 326656
    %v552 = vsel %vm550, %v508, 0
    %554 = vmatpush.msra.mxu0 %v524
    %555 = vmatpush.msra.mxu0 %v523
    %556 = vmatpush.msra.mxu0 %v522
    %557 = vmatpush.msra.mxu0 %v521
    %558 = vmatpush.msra.mxu0 %v520
    %559 = vmatpush.msra.mxu0 %v519
    %560 = vmatpush.msra.mxu0 %v518
    %561 = vmatpush.msra.mxu0 %v517
    %562 = vmatpush.msra.mxu0 %v516
    %563 = vmatpush.msra.mxu0 %v515
    %564 = vmatpush.msra.mxu0 %v514
    %565 = vmatpush.msra.mxu0 %v513
    %566 = vmatpush.msra.mxu0 %v512
    %567 = vmatpush.msra.mxu0 %v511
    %568 = vmatpush.msra.mxu0 %v510
    %569 = vmatpush.msra.mxu0 %v509
    %570 = vmatmul.f32.gmra.mxu0 %v503
    %v571 = vpop.f32.mrf.mxu0
    %v572 = vadd.f32 %v548, %v571
    %573 = vdwg.mxu0
    %574 = vmatpush.msra.mxu0 %v540
    %575 = vmatpush.msra.mxu0 %v539
    %576 = vmatpush.msra.mxu0 %v538
    %577 = vmatpush.msra.mxu0 %v537
    %578 = vmatpush.msra.mxu0 %v536
    %579 = vmatpush.msra.mxu0 %v535
    %580 = vmatpush.msra.mxu0 %v534
    %581 = vmatpush.msra.mxu0 %v533
    %582 = vmatpush.msra.mxu0 %v532
    %583 = vmatpush.msra.mxu0 %v531
    %584 = vmatpush.msra.mxu0 %v530
    %585 = vmatpush.msra.mxu0 %v529
    %586 = vmatpush.msra.mxu0 %v528
    %587 = vmatpush.msra.mxu0 %v527
    %588 = vmatpush.msra.mxu0 %v526
    %589 = vmatpush.msra.mxu0 %v525
    %590 = vmatmul.f32.gmra.mxu0 %v506
    %v591 = vpop.f32.mrf.mxu0
    %v592 = vadd.f32 %v572, %v591
    %593 = vdwg.mxu0
    %594 = vmatpush.msra.mxu0 0.0
    %595 = vmatpush.msra.mxu0 0.0
    %596 = vmatpush.msra.mxu0 0.0
    %597 = vmatpush.msra.mxu0 0.0
    %598 = vmatpush.msra.mxu0 0.0
    %599 = vmatpush.msra.mxu0 0.0
    %600 = vmatpush.msra.mxu0 0.0
    %601 = vmatpush.msra.mxu0 0.0
    %602 = vmatpush.msra.mxu0 0.0
    %603 = vmatpush.msra.mxu0 0.0
    %604 = vmatpush.msra.mxu0 0.0
    %605 = vmatpush.msra.mxu0 %v545
    %606 = vmatpush.msra.mxu0 %v544
    %607 = vmatpush.msra.mxu0 %v543
    %608 = vmatpush.msra.mxu0 %v542
    %609 = vmatpush.msra.mxu0 %v541
    %610 = vmatmul.f32.gmra.mxu0 %v552
    %v611 = vpop.f32.mrf.mxu0
    %v612 = vadd.f32 %v592, %v611
    %613 = vdwg.mxu0
    %614 = vst [vmem:[#allocation2] sm:$0xff] %v612
    // Predicated region
    $region42: #{tpu_custom_call.1} parent=1 // pred_check
      _
    $region43: #{tpu_custom_call.1} parent=1 // pred_check_branch
      %616 = sbr.rel (0) target = $region45
    $region44: #{tpu_custom_call.1} parent=1 // pred_region
      %618 = vsyncadd [#allocation3], 0
      %s620 = sshll.u32 [#allocation2], 4
      %s621 = int_to_ptr.vmem [resolvable:$true] %s620
      %s622 = sshll.u32 %s10, 4
      %s623 = int_to_ptr.hbm [resolvable:$true] %s622
      %625 = dma.vmem_to_hbm [thread:$0]  %s621, 128, %s623, [#allocation3]
    $region45: #{tpu_custom_call.1} parent=1 // pred_fallthru
      _
    // Predicated region
    $region46: #{tpu_custom_call.1} parent=1 // pred_check
      _
    $region47: #{tpu_custom_call.1} parent=1 // pred_check_branch
      %627 = sbr.rel (0) target = $region49
    $region48: #{tpu_custom_call.1} parent=1 // pred_region
      %629 = dma.done [#allocation3], 128
    $region49: #{tpu_custom_call.1} parent=1 // pred_fallthru
      _
    %630 = vsyncpa [#allocation3], 1

</llo_original>
